<compile_context>
chip_gen: v6e
topology: v6e:2x2x1
jax: 0.10.0
libtpu: 0.0.40
codegen_flags: <defaults>
</compile_context>

<pallas_src>
import math

import numpy as np
import jax
import jax.numpy as jnp
from jax.experimental import pallas as pl
from jax.experimental.pallas import tpu as pltpu


def _bilinear_up_matrix(in_size, kernel_size=16, stride=8, padding=4):
    """Dense (out_size, in_size) matrix equivalent to the 1-D slice of the depthwise
    ConvTranspose2d whose weights are set by fill_up_weights()."""
    f = math.ceil(kernel_size / 2)
    c = (2 * f - 1 - f % 2) / (2.0 * f)
    out_size = (in_size - 1) * stride - 2 * padding + kernel_size
    o = np.arange(out_size)[:, None]
    i = np.arange(in_size)[None, :]
    k = o + padding - stride * i                     # tap index into the 16-wide kernel
    g = 1.0 - np.abs(k / f - c)                      # bilinear weight g(k)
    valid = (k >= 0) & (k < kernel_size)
    return np.where(valid, g, 0.0).astype(np.float32)


def _vmem_limit_bytes():
    """VMEM budget with headroom: ~100 MiB on v5e/v6e (128 MiB), ~50 MiB on v7x (64 MiB)."""
    cap = 64 * 1024 * 1024
    try:
        cap = int(pltpu.get_tpu_info().vmem_capacity_bytes)
    except Exception:
        pass
    return int(cap * 0.78)


def _pick_c_tile(c_in, hw, classes, budget):
    """Largest C_in tile (== C_in, or a multiple of 128 dividing C_in) fitting the budget."""
    cands = sorted({c_in} | {c for c in range(128, c_in, 128) if c_in % c == 0},
                   reverse=True)
    for ck in cands:
        vm = (2 * ck * hw * 4           # x block, double buffered, f32
              + 2 * classes * ck * 4    # weight block, double buffered
              + classes * hw * 4        # f32 accumulator scratch
              + 2 * classes * hw * 4)   # seg output block, double buffered
        if vm <= budget:
            return ck
    return cands[-1]


def _pick_oh_tile(oh, h, classes, ow, out_itemsize, budget):
    """Largest OH tile (multiple of 8 dividing OH, or OH itself) fitting the budget."""
    cands = sorted({oh} | {d for d in range(8, oh, 8) if oh % d == 0}, reverse=True)
    fixed = 2 * h * classes * ow * 2                        # t1 block (bf16), double buffered
    for d in cands:
        per = (2 * d * h * 2                                # Uy tile (bf16), double buffered
               + 2 * d * classes * ow * out_itemsize       # output block, double buffered
               + d * classes * ow * 4)                      # yw f32 scratch
        if fixed + per <= budget:
            return d
    return cands[-1]


# --------------------------- kernel 1: seg 1x1 conv --------------------------- #
def seg_conv_kernel(x_ref, w_ref, b_ref, seg_ref, acc_ref):
    # Grid: (N, C_in // ck).  x_ref: (1, ck, H*W) f32; w_ref: (classes, ck) f32;
    # b_ref: (classes, 1) f32; seg_ref: (1, classes, H*W) f32; acc_ref: f32 scratch.
    k = pl.program_id(1)

    @pl.when(k == 0)
    def _init():
        acc_ref[...] = jnp.zeros_like(acc_ref)

    acc_ref[...] += jnp.dot(w_ref[...], x_ref[0],
                            preferred_element_type=jnp.float32)

    @pl.when(k == pl.num_programs(1) - 1)
    def _finalize():
        seg_ref[0] = acc_ref[...] + b_ref[...]


# ----------------- kernel 2: W-direction bilinear upsample -------------------- #
def w_upsample_kernel(s_ref, uxt_ref, t1_ref):
    # s_ref: (1, H*classes, W) bf16 (h-major / class-minor rows); uxt_ref: (W, OW) bf16.
    # ONE merged MXU matmul over all classes; f32 accumulation, bf16 result.
    t1_ref[0] = jnp.dot(s_ref[0], uxt_ref[...],
                        preferred_element_type=jnp.float32).astype(t1_ref.dtype)


# -------------- kernel 3: H-direction upsample + log-softmax ------------------ #
def h_upsample_logsoftmax_kernel(uy_ref, t1_ref, out_ref, yw_ref):
    # uy_ref : (oh_tile, H)            bf16   rows of the H-direction bilinear matrix
    # t1_ref : (1, H, classes*OW)      bf16   W-upsampled seg, lane-dense over classes
    # out_ref: (1, classes, oh_tile, OW)      log-softmax output tile (bf16 by default)
    # yw_ref : (oh_tile, classes*OW)   f32    VMEM scratch; class slices are streamed
    #                                         from here to bound vreg pressure.
    classes = out_ref.shape[1]
    ow = out_ref.shape[3]

    # Single lane-dense batched MXU matmul covering all classes.
    yw_ref[...] = jnp.dot(uy_ref[...], t1_ref[0],
                          preferred_element_type=jnp.float32)

    # log-softmax over classes, all math in f32, streamed per-class from VMEM.
    m = yw_ref[:, 0:ow]
    for c in range(1, classes):
        m = jnp.maximum(m, yw_ref[:, c * ow:(c + 1) * ow])
    ssum = jnp.exp(yw_ref[:, 0:ow] - m)
    for c in range(1, classes):
        ssum = ssum + jnp.exp(yw_ref[:, c * ow:(c + 1) * ow] - m)
    lse = m + jnp.log(ssum)
    for c in range(classes):
        out_ref[0, c] = (yw_ref[:, c * ow:(c + 1) * ow] - lse).astype(out_ref.dtype)


# ----------------------------------- wrapper ---------------------------------- #
def drnseg_forward(x, seg_w, seg_b, *, oh_tile=None, out_dtype=jnp.bfloat16):
    """x: (N, out_dim, H, W) f32 backbone features.
    Returns (log_softmax(up(seg(x))), seg(x)) like DRNSeg.forward."""
    N, C_in, H, W = x.shape
    classes = seg_w.shape[0]
    HW = H * W

    Uy = _bilinear_up_matrix(H)                       # (OH, H)
    Ux = _bilinear_up_matrix(W)                       # (OW, W)
    OH, OW = Uy.shape[0], Ux.shape[0]

    vmem_limit = _vmem_limit_bytes()
    tile_budget = int(vmem_limit * 0.85)

    x_flat = x.reshape(N, C_in, HW).astype(jnp.float32)
    w_f = seg_w.astype(jnp.float32)
    b_col = seg_b.reshape(classes, 1).astype(jnp.float32)
    # Bilinear taps are multiples of 1/16 -> exact in bf16 (fast MXU path).
    uy_b = jnp.asarray(Uy, dtype=jnp.bfloat16)        # (OH, H)
    uxt_b = jnp.asarray(Ux.T, dtype=jnp.bfloat16)     # (W, OW)

    # ---------------- kernel 1: seg = 1x1 conv + bias (C_in tiled) ---------------- #
    ck = _pick_c_tile(C_in, HW, classes, tile_budget)
    nk = C_in // ck
    seg_flat = pl.pallas_call(
        seg_conv_kernel,
        out_shape=jax.ShapeDtypeStruct((N, classes, HW), jnp.float32),
        grid_spec=pltpu.PrefetchScalarGridSpec(
            num_scalar_prefetch=0,
            grid=(N, nk),
            in_specs=[
                pl.BlockSpec((1, ck, HW), lambda n, k: (n, k, 0)),
                pl.BlockSpec((classes, ck), lambda n, k: (0, k)),
                pl.BlockSpec((classes, 1), lambda n, k: (0, 0)),
            ],
            out_specs=pl.BlockSpec((1, classes, HW), lambda n, k: (n, 0, 0)),
            scratch_shapes=[pltpu.VMEM((classes, HW), jnp.float32)],
        ),
        compiler_params=pltpu.CompilerParams(
            dimension_semantics=("parallel", "arbitrary"),
            vmem_limit_bytes=vmem_limit),
        cost_estimate=pl.CostEstimate(
            flops=int(2 * N * classes * C_in * HW),
            transcendentals=0,
            bytes_accessed=int(4 * (N * C_in * HW + classes * C_in + classes
                                    + N * classes * HW))),
    )(x_flat, w_f, b_col)

    # XLA layout plumbing on the tiny seg tensor (classes*H*W elements):
    # (N, classes, H, W) -> (N, H*classes, W) so kernel 2 is one merged matmul and
    # kernel 3 gets its lane-dense operand via a free row-major reshape below.
    s_hw = (seg_flat.reshape(N, classes, H, W)
            .transpose(0, 2, 1, 3)
            .reshape(N, H * classes, W)
            .astype(jnp.bfloat16))

    # ---------------- kernel 2: W-direction upsample ----------------------------- #
    # TODO(synk): grid-invariant uxt_b could use pipeline_mode=pl.Buffered(1) to save VMEM.
    t1 = pl.pallas_call(
        w_upsample_kernel,
        out_shape=jax.ShapeDtypeStruct((N, H * classes, OW), jnp.bfloat16),
        grid_spec=pltpu.PrefetchScalarGridSpec(
            num_scalar_prefetch=0,
            grid=(N,),
            in_specs=[
                pl.BlockSpec((1, H * classes, W), lambda n: (n, 0, 0)),
                pl.BlockSpec((W, OW), lambda n: (0, 0)),
            ],
            out_specs=pl.BlockSpec((1, H * classes, OW), lambda n: (n, 0, 0)),
        ),
        compiler_params=pltpu.CompilerParams(
            dimension_semantics=("parallel",),
            vmem_limit_bytes=vmem_limit),
        cost_estimate=pl.CostEstimate(
            flops=int(2 * N * H * classes * W * OW),
            transcendentals=0,
            bytes_accessed=int(2 * (N * H * classes * W + W * OW
                                    + N * H * classes * OW))),
    )(s_hw, uxt_b)

    # Free row-major reshape in HBM: (N, H*classes, OW) == (N, H, classes*OW).
    t1 = t1.reshape(N, H, classes * OW)

    # ---------------- kernel 3: H-direction upsample + log-softmax --------------- #
    out_itemsize = jnp.dtype(out_dtype).itemsize
    if oh_tile is None:
        oh_tile = _pick_oh_tile(OH, H, classes, OW, out_itemsize, tile_budget)
    assert OH % oh_tile == 0 and (oh_tile % 8 == 0 or oh_tile == OH)

    log_probs = pl.pallas_call(
        h_upsample_logsoftmax_kernel,
        out_shape=jax.ShapeDtypeStruct((N, classes, OH, OW), out_dtype),
        grid_spec=pltpu.PrefetchScalarGridSpec(
            num_scalar_prefetch=0,
            grid=(N, OH // oh_tile),
            in_specs=[
                pl.BlockSpec((oh_tile, H), lambda n, t: (t, 0)),
                pl.BlockSpec((1, H, classes * OW), lambda n, t: (n, 0, 0)),
            ],
            out_specs=pl.BlockSpec((1, classes, oh_tile, OW),
                                   lambda n, t: (n, 0, t, 0)),
            scratch_shapes=[pltpu.VMEM((oh_tile, classes * OW), jnp.float32)],
        ),
        compiler_params=pltpu.CompilerParams(
            dimension_semantics=("parallel", "parallel"),   # no prologue -> v7x core split OK
            vmem_limit_bytes=vmem_limit),
        cost_estimate=pl.CostEstimate(
            flops=int(2 * N * classes * OH * H * OW + 6 * N * classes * OH * OW),
            transcendentals=int(N * classes * OH * OW + N * OH * OW),
            bytes_accessed=int(2 * (OH * H + N * H * classes * OW)
                               + out_itemsize * N * classes * OH * OW)),
    )(uy_b, t1)

    return log_probs, seg_flat.reshape(N, classes, H, W)


# ------------------------------------- main ----------------------------------- #
if __name__ == "__main__":
    # Small shapes consistent with the module's forward:
    # feature map (post-base) N=2, out_dim=8, 16x16 ; classes=4 ; up scale = 8.
    N, C_in, H, W = 2, 8, 16, 16
    classes = 4

    key = jax.random.PRNGKey(0)
    kx, kw = jax.random.split(key)
    x = jax.random.normal(kx, (N, C_in, H, W), dtype=jnp.float32)

    # seg init as in the module: weight ~ N(0, sqrt(2/n)) with n = kH*kW*out_channels; bias = 0.
    n_fan = 1 * 1 * classes
    seg_w = jax.random.normal(kw, (classes, C_in), dtype=jnp.float32) * math.sqrt(2.0 / n_fan)
    seg_b = jnp.zeros((classes,), dtype=jnp.float32)

    # oh_tile=64 -> 2 OH tiles per batch element, exercising the tiled/parallel path.
    log_probs, seg_out = drnseg_forward(x, seg_w, seg_b, oh_tile=64)
    jax.block_until_ready(log_probs)
    jax.block_until_ready(seg_out)

    # ---- validation ----
    # seg (1x1 conv, f32) must match the f32 reference tightly.
    ref_seg = jnp.einsum("oc,nchw->nohw", seg_w, x) + seg_b[None, :, None, None]
    assert jnp.allclose(seg_out, ref_seg, atol=1e-4, rtol=1e-4)

    # Upsample + log-softmax reference using the same bf16 operand casts the kernels use
    # (f32 accumulation), seeded from the kernel's own seg output.
    Uy = _bilinear_up_matrix(H)
    Ux = _bilinear_up_matrix(W)
    uy_b = jnp.asarray(Uy, jnp.bfloat16)
    uxt_b = jnp.asarray(Ux.T, jnp.bfloat16)
    s_b = seg_out.astype(jnp.bfloat16)
    t1_ref = jnp.einsum("nchw,wq->nchq", s_b, uxt_b,
                        preferred_element_type=jnp.float32).astype(jnp.bfloat16)
    y_ref = jnp.einsum("ph,nchq->ncpq", uy_b, t1_ref,
                       preferred_element_type=jnp.float32)
    ref_log = jax.nn.log_softmax(y_ref, axis=1)

    lp = log_probs.astype(jnp.float32)
    assert jnp.allclose(lp, ref_log, atol=5e-2, rtol=5e-2)
    # log-softmax invariant: probabilities sum to 1 over the class dim (bf16 output).
    assert jnp.allclose(jnp.exp(lp).sum(axis=1), 1.0, atol=2e-2)
    assert log_probs.shape == (N, classes, 8 * H, 8 * W)
    assert seg_out.shape == (N, classes, H, W)

    print("KERNEL_OK")
</pallas_src>

<mosaic_0001>
module attributes {stable_mosaic.version = 11 : i64} {
  func.func @seg_conv_kernel(%arg0: i32, %arg1: i32, %arg2: memref<1x8x256xf32, #tpu.memory_space<vmem>>, %arg3: memref<4x8xf32, #tpu.memory_space<vmem>>, %arg4: memref<4x1xf32, #tpu.memory_space<vmem>>, %arg5: memref<1x4x256xf32, #tpu.memory_space<vmem>>, %arg6: memref<4x256xf32, #tpu.memory_space<vmem>>) attributes {dimension_semantics = [#tpu.dimension_semantics<parallel>, #tpu.dimension_semantics<arbitrary>], iteration_bounds = array<i64: 2, 1>, scalar_prefetch = 0 : i64, scratch_operands = 1 : i64, tpu.core_type = #tpu.core_type<tc>, window_params = [{transform_indices = @transform_0, window_bounds = array<i64: 1, 8, 256>}, {transform_indices = @transform_1, window_bounds = array<i64: 4, 8>}, {pipeline_mode = #tpu.pipeline_mode<synchronous>, transform_indices = @transform_2, window_bounds = array<i64: 4, 1>}, {transform_indices = @transform_3, window_bounds = array<i64: 1, 4, 256>}]} {
    %c0_i32 = arith.constant 0 : i32
    %0 = arith.cmpi eq, %arg1, %c0_i32 : i32
    %1 = arith.extui %0 : i1 to i32
    %c0_i32_0 = arith.constant 0 : i32
    %2 = arith.cmpi ne, %1, %c0_i32_0 : i32
    scf.if %2 {
      %cst_11 = arith.constant 0.000000e+00 : f32
      %13 = vector.broadcast %cst_11 : f32 to vector<4x256xf32>
      %c0_12 = arith.constant 0 : index
      %c0_13 = arith.constant 0 : index
      %14 = vector.load %arg6[%c0_12, %c0_13] : memref<4x256xf32, #tpu.memory_space<vmem>>, vector<4x256xf32>
      tpu.vector_store %arg6[%c0_12, %c0_13], %13 {strides = array<i32>} : memref<4x256xf32, #tpu.memory_space<vmem>>, vector<4x256xf32>,
    } else {
    }
    %c0 = arith.constant 0 : index
    %c0_1 = arith.constant 0 : index
    %3 = vector.load %arg6[%c0, %c0_1] : memref<4x256xf32, #tpu.memory_space<vmem>>, vector<4x256xf32>
    %c0_2 = arith.constant 0 : index
    %c0_3 = arith.constant 0 : index
    %4 = vector.load %arg3[%c0_2, %c0_3] : memref<4x8xf32, #tpu.memory_space<vmem>>, vector<4x8xf32>
    %c0_4 = arith.constant 0 : index
    %c0_5 = arith.constant 0 : index
    %c0_6 = arith.constant 0 : index
    %5 = vector.load %arg2[%c0_4, %c0_5, %c0_6] : memref<1x8x256xf32, #tpu.memory_space<vmem>>, vector<1x8x256xf32>
    %6 = vector.shape_cast %5 : vector<1x8x256xf32> to vector<8x256xf32>
    %cst = arith.constant dense<0.000000e+00> : vector<4x256xf32>
    %7 = tpu.matmul %4, %6, %cst {dimension_numbers = #tpu.dot_dimension_numbers<[1], [0], [0], [1], [0, 0, 1, 1], [], []>} : vector<4x8xf32>, vector<8x256xf32>, vector<4x256xf32> -> vector<4x256xf32>
    %8 = arith.addf %3, %7 : vector<4x256xf32>
    %c0_7 = arith.constant 0 : index
    %c0_8 = arith.constant 0 : index
    %9 = vector.load %arg6[%c0_7, %c0_8] : memref<4x256xf32, #tpu.memory_space<vmem>>, vector<4x256xf32>
    tpu.vector_store %arg6[%c0_7, %c0_8], %8 {strides = array<i32>} : memref<4x256xf32, #tpu.memory_space<vmem>>, vector<4x256xf32>,
    %c0_i32_9 = arith.constant 0 : i32
    %10 = arith.cmpi eq, %arg1, %c0_i32_9 : i32
    %11 = arith.extui %10 : i1 to i32
    %c0_i32_10 = arith.constant 0 : i32
    %12 = arith.cmpi ne, %11, %c0_i32_10 : i32
    scf.if %12 {
      %c0_11 = arith.constant 0 : index
      %c0_12 = arith.constant 0 : index
      %13 = vector.load %arg6[%c0_11, %c0_12] : memref<4x256xf32, #tpu.memory_space<vmem>>, vector<4x256xf32>
      %c0_13 = arith.constant 0 : index
      %c0_14 = arith.constant 0 : index
      %14 = vector.load %arg4[%c0_13, %c0_14] : memref<4x1xf32, #tpu.memory_space<vmem>>, vector<4x1xf32>
      %15 = vector.broadcast %14 : vector<4x1xf32> to vector<4x256xf32>
      %16 = arith.addf %13, %15 : vector<4x256xf32>
      %c0_15 = arith.constant 0 : index
      %c0_16 = arith.constant 0 : index
      %c0_17 = arith.constant 0 : index
      %17 = vector.load %arg5[%c0_15, %c0_16, %c0_17] : memref<1x4x256xf32, #tpu.memory_space<vmem>>, vector<1x4x256xf32>
      %18 = vector.shape_cast %17 : vector<1x4x256xf32> to vector<4x256xf32>
      %19 = vector.shape_cast %16 : vector<4x256xf32> to vector<1x4x256xf32>
      tpu.vector_store %arg5[%c0_15, %c0_16, %c0_17], %19 {strides = array<i32>} : memref<1x4x256xf32, #tpu.memory_space<vmem>>, vector<1x4x256xf32>,
    } else {
    }
    return
  }
  func.func @transform_0(%arg0: i32, %arg1: i32) -> (i32, i32, i32) {
    %c0_i32 = arith.constant 0 : i32
    %c0_i32_0 = arith.constant 0 : i32
    return %arg0, %arg1, %c0_i32 : i32, i32, i32
  }
  func.func @transform_1(%arg0: i32, %arg1: i32) -> (i32, i32) {
    %c0_i32 = arith.constant 0 : i32
    %c0_i32_0 = arith.constant 0 : i32
    return %c0_i32, %arg1 : i32, i32
  }
  func.func @transform_2(%arg0: i32, %arg1: i32) -> (i32, i32) {
    %c0_i32 = arith.constant 0 : i32
    %c0_i32_0 = arith.constant 0 : i32
    %c0_i32_1 = arith.constant 0 : i32
    return %c0_i32, %c0_i32_0 : i32, i32
  }
  func.func @transform_3(%arg0: i32, %arg1: i32) -> (i32, i32, i32) {
    %c0_i32 = arith.constant 0 : i32
    %c0_i32_0 = arith.constant 0 : i32
    %c0_i32_1 = arith.constant 0 : i32
    return %arg0, %c0_i32, %c0_i32_0 : i32, i32, i32
  }
}

</mosaic_0001>

<llo_original>
// kernel: tpu_custom_call.1
$region0: #{tpu_custom_call.1}
  #allocation0 [shape = 'u32[]', space=smem, size = 0x4, offset = 0x4, fixed_abs, tag = 'smem constant byte address 0x4 - core index']
  #allocation1 [shape = 'u32[144,128]{1,0:T(1,128)}', space=vmem, size = 0x12000, scoped, tag = 'internal scratch']
  #allocation2 [shape = 'f32[4,256]{1,0:T(4,128)}', space=vmem, size = 0x1000, scoped, tag = 'scratch operand']
  %s0 = inlined_call_operand.hbm [shape: f32[2,8,256], index: 0, kind: input, shape index: {}]
  %s1 = inlined_call_operand.vmem [shape: f32[4,8], index: 1, kind: input, shape index: {}]
  %s2 = inlined_call_operand.vmem [shape: f32[4,1], index: 2, kind: input, shape index: {}]
  %s3 = inlined_call_operand.hbm [shape: f32[2,4,256], index: 3, kind: output, shape index: {}]
  %s4 = sld [smem:[#allocation0]]
  $region57: #{tpu_custom_call.1} parent=0
    _
  %s6 = ssub.s32 1, %s4
  %s7 = scalar_select 0, %s6, %s4
  $region1: #{tpu_custom_call.1} parent=0
    #allocation3 [shape = 'u8[16384]{0}', space=vmem, size = 0x4000, scoped, tag = 'input window, operand 0']
    #allocation4 [shape = 's32[2]{0}', space=sflag, size = 0x8, scoped, tag = 'scoped memory for tpu_custom_call.1']
    #allocation5 [shape = 's32[2]{0}', space=sflag, size = 0x8, scoped, tag = 'scoped memory for tpu_custom_call.1']
    #allocation6 [shape = 'u8[8192]{0}', space=vmem, size = 0x2000, scoped, tag = 'output window, operand 0']
    %8 = vsyncpa [#allocation4], 0
    %s9 = scalar_lea.sflag [#allocation4], 1
    %10 = vsyncpa %s9, 0
    %11 = vsyncpa [#allocation5], 0
    %s12 = scalar_lea.sflag [#allocation5], 1
    %13 = vsyncpa %s12, 0
    loop: start=0, step=1, limit=4
    $region2: #{tpu_custom_call.1} parent=1 // loop_pre_header
      _
    $region3: #{tpu_custom_call.1} parent=1 // loop_header
      %s15 = sphi 0, %s19
      %p16 = scmp.ge.s32.totalorder %s15, 4
      %s22 = sphi 0, %s34
      %s23 = sphi 0, %s30
      %s24 = sphi 0, %s22
      %s25 = sphi 0, %s23
      %s26 = sphi 0, %s24
      %s27 = sphi 0, %s25
      %s39 = sphi 0, %s41
      %s42 = sphi 0, %s39
      %s43 = sphi 0, %s42
      %s59 = sphi 0, %s43
      %s65 = sphi 0, %s67
      %s68 = sphi 0, %s65
      %s69 = sphi 0, %s68
      %s85 = sphi 0, %s69
      %s89 = sphi 0, %s89
      %s91 = sphi 0, %s89
      %s92 = sphi 0, %s91
      %s106 = sphi 0, %s92
      %s112 = sphi 0, %s114
      %s115 = sphi 0, %s112
      %s116 = sphi 0, %s115
      %s132 = sphi 0, %s116
    $region4: #{tpu_custom_call.1} parent=1 // loop_header_branch
      %18 = sbr.rel (%p16) target = $region8
    $region5: #{tpu_custom_call.1} parent=1 // loop_body
      %s20 = ssub.s32 %s15, 1
      %s21 = ssub.s32 %s15, 2
      %s28 = sadd.s32 1, %s23
      %p29 = scmp.ge.s32.totalorder %s28, 1
      %s30 = scalar_select %p29, 0, %s28
      %s31 = sadd.s32 1, %s22
      %s32 = scalar_select %p29, %s31, %s22
      %p33 = scmp.ge.s32.totalorder %s32, 2
      %s34 = scalar_select %p33, 0, %s32
      %s35 = ssub.s32 %s22, %s34
      %s36 = ssub.s32 %s23, %s30
      %s37 = sor.u32 %s35, %s36
      %p38 = scmp.eq.s32.totalorder %s37, 0
      %s40 = sadd.s32 %s39, 1
      %s41 = scalar_select %p38, %s39, %s40
      %p44 = pneg %p38
      %p45 = scmp.eq.s32.totalorder %s15, 1
      %p46 = por %p44, %p45
      %p47 = scmp.ne.s32.totalorder %s39, %s42
      %p48 = scmp.eq.s32.totalorder %s15, 0
      %p49 = por %p47, %p48
      %p50 = scmp.ne.s32.totalorder %s39, %s42
      %p51 = scmp.eq.s32.totalorder %s20, 1
      %p52 = por %p50, %p51
      %p53 = scmp.ne.s32.totalorder %s42, %s43
      %p54 = scmp.eq.s32.totalorder %s20, 0
      %p55 = por %p53, %p54
      %p56 = scmp.ne.s32.totalorder %s42, %s43
      %p57 = scmp.eq.s32.totalorder %s21, 1
      %p58 = por %p56, %p57
      %p60 = scmp.ne.s32.totalorder %s43, %s59
      %p61 = scmp.eq.s32.totalorder %s21, 0
      %p62 = por %p60, %p61
      %s63 = ssub.s32 %s23, %s30
      %p64 = scmp.eq.s32.totalorder %s63, 0
      %s66 = sadd.s32 %s65, 1
      %s67 = scalar_select %p64, %s65, %s66
      %p70 = pneg %p64
      %p71 = scmp.eq.s32.totalorder %s15, 1
      %p72 = por %p70, %p71
      %p73 = scmp.ne.s32.totalorder %s65, %s68
      %p74 = scmp.eq.s32.totalorder %s15, 0
      %p75 = por %p73, %p74
      %p76 = scmp.ne.s32.totalorder %s65, %s68
      %p77 = scmp.eq.s32.totalorder %s20, 1
      %p78 = por %p76, %p77
      %p79 = scmp.ne.s32.totalorder %s68, %s69
      %p80 = scmp.eq.s32.totalorder %s20, 0
      %p81 = por %p79, %p80
      %p82 = scmp.ne.s32.totalorder %s68, %s69
      %p83 = scmp.eq.s32.totalorder %s21, 1
      %p84 = por %p82, %p83
      %p86 = scmp.ne.s32.totalorder %s69, %s85
      %p87 = scmp.eq.s32.totalorder %s21, 0
      %p88 = por %p86, %p87
      %s90 = sadd.s32 %s89, 1
      %p93 = scmp.eq.s32.totalorder %s15, 1
      %p94 = scmp.ne.s32.totalorder %s89, %s91
      %p95 = scmp.eq.s32.totalorder %s15, 0
      %p96 = por %p94, %p95
      %p97 = scmp.ne.s32.totalorder %s89, %s91
      %p98 = scmp.eq.s32.totalorder %s20, 1
      %p99 = por %p97, %p98
      %p100 = scmp.ne.s32.totalorder %s91, %s92
      %p101 = scmp.eq.s32.totalorder %s20, 0
      %p102 = por %p100, %p101
      %p103 = scmp.ne.s32.totalorder %s91, %s92
      %p104 = scmp.eq.s32.totalorder %s21, 1
      %p105 = por %p103, %p104
      %p107 = scmp.ne.s32.totalorder %s92, %s106
      %p108 = scmp.eq.s32.totalorder %s21, 0
      %p109 = por %p107, %p108
      %s110 = ssub.s32 %s22, %s34
      %p111 = scmp.eq.s32.totalorder %s110, 0
      %s113 = sadd.s32 %s112, 1
      %s114 = scalar_select %p111, %s112, %s113
      %p117 = pneg %p111
      %p118 = scmp.eq.s32.totalorder %s15, 1
      %p119 = por %p117, %p118
      %p120 = scmp.ne.s32.totalorder %s112, %s115
      %p121 = scmp.eq.s32.totalorder %s15, 0
      %p122 = por %p120, %p121
      %p123 = scmp.ne.s32.totalorder %s112, %s115
      %p124 = scmp.eq.s32.totalorder %s20, 1
      %p125 = por %p123, %p124
      %p126 = scmp.ne.s32.totalorder %s115, %s116
      %p127 = scmp.eq.s32.totalorder %s20, 0
      %p128 = por %p126, %p127
      %p129 = scmp.ne.s32.totalorder %s115, %s116
      %p130 = scmp.eq.s32.totalorder %s21, 1
      %p131 = por %p129, %p130
      %p133 = scmp.ne.s32.totalorder %s116, %s132
      %p134 = scmp.eq.s32.totalorder %s21, 0
      %p135 = por %p133, %p134
      %p136 = scmp.le.s32.totalorder 1, %s15
      %p137 = scmp.lt.s32.totalorder %s15, 3
      %p138 = pnand %p136, %p137
      %p139 = pneg %p138
      // Predicated region
      $region9: #{tpu_custom_call.1} parent=5 // pred_check
        _
      $region10: #{tpu_custom_call.1} parent=5 // pred_check_branch
        %141 = sbr.rel (%p138) target = $region12
      $region11: #{tpu_custom_call.1} parent=5 // pred_region
        %s142 = ssub.s32 %s15, 1
        // Predicated region
        $region13: #{tpu_custom_call.1} parent=11 // pred_check
          %p143 = pneg %p81
        $region14: #{tpu_custom_call.1} parent=11 // pred_check_branch
          %145 = sbr.rel (%p143) target = $region16
        $region15: #{tpu_custom_call.1} parent=11 // pred_region
          %p146 = scmp.lt.s32.totalorder %s25, 0
          %s147 = scalar_select %p146, %s25, 0
          %s148 = smul.addr %s147, 4
          %s149 = scalar_lea.vmem %s1, %s148
        $region16: #{tpu_custom_call.1} parent=11 // pred_fallthru
          _
        // Predicated region
        $region17: #{tpu_custom_call.1} parent=11 // pred_check
          %p150 = pneg %p102
        $region18: #{tpu_custom_call.1} parent=11 // pred_check_branch
          %152 = sbr.rel (%p150) target = $region20
        $region19: #{tpu_custom_call.1} parent=11 // pred_region
          _
        $region20: #{tpu_custom_call.1} parent=11 // pred_fallthru
          _
      $region12: #{tpu_custom_call.1} parent=5 // pred_fallthru
        _
      %p153 = scmp.lt.s32.totalorder %s15, 2
      // Predicated region
      $region21: #{tpu_custom_call.1} parent=5 // pred_check
        %p154 = pneg %p153
      $region22: #{tpu_custom_call.1} parent=5 // pred_check_branch
        %156 = sbr.rel (%p154) target = $region24
      $region23: #{tpu_custom_call.1} parent=5 // pred_region
        // Predicated region
        $region25: #{tpu_custom_call.1} parent=23 // pred_check
          %p157 = pneg %p49
        $region26: #{tpu_custom_call.1} parent=23 // pred_check_branch
          %159 = sbr.rel (%p157) target = $region28
        $region27: #{tpu_custom_call.1} parent=23 // pred_region
          %s160 = sand.u32 %s39, 1
          %s161 = scalar_lea.sflag [#allocation4], %s160
          %s162 = sand.u32 %s39, 1
          %s163 = smul.addr %s162, 16
          %s164 = scalar_lea.vmem [#allocation3], %s163
          %s166 = ssub.s32 256, 256
          %167 = vsyncadd %s161, %s166
          %s168 = smul.addr %s23, 2
          %s169 = smul.addr %s22, 2
          %s170 = sadd.s32 %s168, %s169
          %s171 = smul.addr %s170, 128
          %s172 = scalar_lea.hbm %s0, %s171
          %s174 = sshll.u32 %s164, 4
          %s175 = int_to_ptr.vmem [resolvable:$true] %s174
          %177 = dma.hbm_to_vmem [thread:$0]  %s172, 256, %s175, %s161
        $region28: #{tpu_custom_call.1} parent=23 // pred_fallthru
          _
      $region24: #{tpu_custom_call.1} parent=5 // pred_fallthru
        _
      %p178 = scmp.le.s32.totalorder 1, %s15
      %p179 = scmp.lt.s32.totalorder %s15, 3
      %p180 = pnand %p178, %p179
      %p181 = pneg %p180
      // Predicated region
      $region29: #{tpu_custom_call.1} parent=5 // pred_check
        _
      $region30: #{tpu_custom_call.1} parent=5 // pred_check_branch
        %183 = sbr.rel (%p180) target = $region32
      $region31: #{tpu_custom_call.1} parent=5 // pred_region
        %s184 = ssub.s32 %s15, 1
        %s185 = sand.u32 %s42, 1
        %s186 = scalar_lea.sflag [#allocation4], %s185
        %s187 = sand.u32 %s42, 1
        %s188 = smul.addr %s187, 16
        %s189 = scalar_lea.vmem [#allocation3], %s188
        // Predicated region
        $region33: #{tpu_custom_call.1} parent=31 // pred_check
          %p190 = pneg %p55
        $region34: #{tpu_custom_call.1} parent=31 // pred_check_branch
          %192 = sbr.rel (%p190) target = $region36
        $region35: #{tpu_custom_call.1} parent=31 // pred_region
          %193 = dma.done %s186, 256
        $region36: #{tpu_custom_call.1} parent=31 // pred_fallthru
          _
        %s194 = sand.u32 %s42, 1
        %s195 = scalar_lea.sflag [#allocation4], %s194
        %s196 = sand.u32 %s42, 1
        %s197 = smul.addr %s196, 16
        %s198 = scalar_lea.vmem [#allocation3], %s197
        %p199 = pneg %p55
        %p200 = pneg %p52
        %p201 = scmp.lt.s32.totalorder %s25, 0
        %s202 = scalar_select %p201, %s25, 0
        %s203 = smul.addr %s202, 4
        %s204 = scalar_lea.vmem %s1, %s203
        %p205 = pneg %p81
        %p206 = pneg %p78
        %p207 = pneg %p102
        %p208 = pneg %p99
        %p209 = pneg %p128
        %p210 = pneg %p125
        %s211 = sand.u32 %s115, 1
        %s212 = scalar_lea.sflag [#allocation5], %s211
        %s213 = sand.u32 %s115, 1
        %s214 = smul.addr %s213, 8
        %s215 = scalar_lea.vmem [#allocation6], %s214
        %p216 = scmp.lt.s32.totalorder %s25, 0
        %s217 = scalar_select %p216, %s25, 0
        %s218 = smul.addr %s217, 4
        %s219 = scalar_lea.vmem %s1, %s218
        %p220 = scmp.eq.s32.totalorder %s25, 0
        // Predicated region
        $region37: #{tpu_custom_call.1} parent=31 // pred_check
          %p221 = pneg %p220
        $region38: #{tpu_custom_call.1} parent=31 // pred_check_branch
          %223 = sbr.rel (%p221) target = $region40
        $region39: #{tpu_custom_call.1} parent=31 // pred_region
          %224 = vst [vmem:[#allocation2] sm:$0xff] 0.0
        $region40: #{tpu_custom_call.1} parent=31 // pred_fallthru
          _
        %v225 = vld [vmem:[#allocation2] sm:$0xff]
        %v226 = vld [vmem:[%s219] sm:$0xf]
        %v227 = vld [vmem:[%s189] sm:$0xff]
        %v228 = vld [vmem:[%s189 + $0x8] sm:$0xff]
        %vm229 = vcmask 64512
        %v231 = vsel %vm229, %v226, 0
        %233 = vmatprep.subr.mxu0 0.0
        %234 = vmatpush1.msra.mxu0 0.0
        %235 = vmatprep.subr.mxu0 0.0
        %236 = vmatpush1.msra.mxu0 0.0
        %237 = vmatprep.subr.mxu0 0.0
        %238 = vmatpush1.msra.mxu0 0.0
        %239 = vmatprep.subr.mxu0 0.0
        %240 = vmatpush1.msra.mxu0 0.0
        %241 = vmatprep.subr.mxu0 0.0
        %242 = vmatpush1.msra.mxu0 0.0
        %243 = vmatprep.subr.mxu0 0.0
        %244 = vmatpush1.msra.mxu0 0.0
        %245 = vmatprep.subr.mxu0 0.0
        %246 = vmatpush1.msra.mxu0 0.0
        %247 = vmatprep.subr.mxu0 0.0
        %248 = vmatpush1.msra.mxu0 0.0
        %249 = vmatprep.subr.mxu0 0.0
        %250 = vmatpush1.msra.mxu0 0.0
        %251 = vmatprep.subr.mxu0 0.0
        %252 = vmatpush1.msra.mxu0 0.0
        %253 = vmatprep.subr.mxu0 0.0
        %254 = vmatpush1.msra.mxu0 0.0
        %255 = vmatprep.subr.mxu0 0.0
        %256 = vmatpush1.msra.mxu0 0.0
        %257 = vmatprep.subr.mxu0 0.0
        %258 = vmatpush1.msra.mxu0 0.0
        %259 = vmatprep.subr.mxu0 0.0
        %260 = vmatpush1.msra.mxu0 0.0
        %261 = vmatprep.subr.mxu0 0.0
        %262 = vmatpush1.msra.mxu0 0.0
        %263 = vmatprep.subr.mxu0 %v228
        %264 = vmatpush1.msra.mxu0 %v227
        %265 = vmatprep.subr.mxu0 0.0
        %266 = vmatpush2.msra.mxu0 0.0
        %267 = vmatprep.subr.mxu0 0.0
        %268 = vmatpush2.msra.mxu0 0.0
        %269 = vmatprep.subr.mxu0 0.0
        %270 = vmatpush2.msra.mxu0 0.0
        %271 = vmatprep.subr.mxu0 0.0
        %272 = vmatpush2.msra.mxu0 0.0
        %273 = vmatprep.subr.mxu0 0.0
        %274 = vmatpush2.msra.mxu0 0.0
        %275 = vmatprep.subr.mxu0 0.0
        %276 = vmatpush2.msra.mxu0 0.0
        %277 = vmatprep.subr.mxu0 0.0
        %278 = vmatpush2.msra.mxu0 0.0
        %279 = vmatprep.subr.mxu0 0.0
        %280 = vmatpush2.msra.mxu0 0.0
        %281 = vmatprep.subr.mxu0 0.0
        %282 = vmatpush2.msra.mxu0 0.0
        %283 = vmatprep.subr.mxu0 0.0
        %284 = vmatpush2.msra.mxu0 0.0
        %285 = vmatprep.subr.mxu0 0.0
        %286 = vmatpush2.msra.mxu0 0.0
        %287 = vmatprep.subr.mxu0 0.0
        %288 = vmatpush2.msra.mxu0 0.0
        %289 = vmatprep.subr.mxu0 0.0
        %290 = vmatpush2.msra.mxu0 0.0
        %291 = vmatprep.subr.mxu0 0.0
        %292 = vmatpush2.msra.mxu0 0.0
        %293 = vmatprep.subr.mxu0 0.0
        %294 = vmatpush2.msra.mxu0 0.0
        %295 = vmatprep.subr.mxu0 0.0
        %296 = vmatpush2.msra.mxu0 0.0
        %297 = vmatprep.mubr.f32.mxu0 0.0
        %298 = vmatmul.mubr.f32.gmra.mxu0 %v231
        %v299 = vpop.f32.mrf.mxu0
        %v300 = vadd.f32 0.0, %v299
        %v301 = vpop.f32.mrf.mxu0
        %v302 = vadd.f32 0.0, %v301
        %303 = vdwg.mxu0
        %v306 = vcombine.low %v300, %v302
        %v308 = vadd.f32 %v225, %v306
        %309 = vst [vmem:[#allocation2] sm:$0xff] %v308
        // Predicated region
        $region41: #{tpu_custom_call.1} parent=31 // pred_check
          %p310 = pneg %p220
        $region42: #{tpu_custom_call.1} parent=31 // pred_check_branch
          %312 = sbr.rel (%p310) target = $region44
        $region43: #{tpu_custom_call.1} parent=31 // pred_region
          %v313 = vld [vmem:[#allocation2] sm:$0xff]
          %v314 = vld [vmem:[%s2] sm:$0xf]
          %316 = vset.pattern.permute.xlu0 0
          %317 = vperm.xlu0 %316, %v314
          %v318 = vpop.permute.xlu0 %317
          %v320 = vunpack.c.l.s4 839922192
          %v321 = vunpack.c.0.s8 %v320
          %v322 = vlaneseq
          %v323 = vshrl.u32 %v322, 7
          %v324 = vsub.s32 %v321, %v323
          %v325 = vrot.slane %v318, %v324
          %v327 = vadd.f32 %v313, %v325
          %328 = vst [vmem:[%s215] sm:$0xff] %v327
        $region44: #{tpu_custom_call.1} parent=31 // pred_fallthru
          _
        %s329 = sand.u32 %s115, 1
        %s330 = scalar_lea.sflag [#allocation5], %s329
        %s331 = sand.u32 %s115, 1
        %s332 = smul.addr %s331, 8
        %s333 = scalar_lea.vmem [#allocation6], %s332
        // Predicated region
        $region45: #{tpu_custom_call.1} parent=31 // pred_check
          %p334 = pneg %p125
        $region46: #{tpu_custom_call.1} parent=31 // pred_check_branch
          %336 = sbr.rel (%p334) target = $region48
        $region47: #{tpu_custom_call.1} parent=31 // pred_region
          %s338 = ssub.s32 128, 128
          %339 = vsyncadd %s330, %s338
          %s340 = smul.addr %s24, 2
          %s341 = smul.addr %s340, 64
          %s342 = scalar_lea.hbm %s3, %s341
          %s344 = sshll.u32 %s333, 4
          %s345 = int_to_ptr.vmem [resolvable:$true] %s344
          %347 = dma.vmem_to_hbm [thread:$0]  %s345, 128, %s342, %s330
        $region48: #{tpu_custom_call.1} parent=31 // pred_fallthru
          _
      $region32: #{tpu_custom_call.1} parent=5 // pred_fallthru
        _
      %p348 = scmp.le.s32.totalorder 2, %s15
      // Predicated region
      $region49: #{tpu_custom_call.1} parent=5 // pred_check
        %p349 = pneg %p348
      $region50: #{tpu_custom_call.1} parent=5 // pred_check_branch
        %351 = sbr.rel (%p349) target = $region52
      $region51: #{tpu_custom_call.1} parent=5 // pred_region
        %s352 = ssub.s32 %s15, 2
        // Predicated region
        $region53: #{tpu_custom_call.1} parent=51 // pred_check
          %p353 = pneg %p131
        $region54: #{tpu_custom_call.1} parent=51 // pred_check_branch
          %355 = sbr.rel (%p353) target = $region56
        $region55: #{tpu_custom_call.1} parent=51 // pred_region
          %s356 = sand.u32 %s116, 1
          %s357 = scalar_lea.sflag [#allocation5], %s356
          %s358 = sand.u32 %s116, 1
          %s359 = smul.addr %s358, 8
          %s360 = scalar_lea.vmem [#allocation6], %s359
          %361 = dma.done %s357, 128
        $region56: #{tpu_custom_call.1} parent=51 // pred_fallthru
          _
      $region52: #{tpu_custom_call.1} parent=5 // pred_fallthru
        _
    $region6: #{tpu_custom_call.1} parent=1 // loop_footer
      %s19 = sadd.s32 1, %s15
    $region7: #{tpu_custom_call.1} parent=1 // loop_footer_branch
      %14 = sbr.rel target = $region3
    $region8: #{tpu_custom_call.1} parent=1 // loop_exit
      _
    %362 = vsyncpa [#allocation4], 1
    %s363 = scalar_lea.sflag [#allocation4], 1
    %364 = vsyncpa %s363, 1
    %365 = vsyncpa [#allocation5], 1
    %s366 = scalar_lea.sflag [#allocation5], 1
    %367 = vsyncpa %s366, 1

</llo_original>
